<compile_context>
chip_gen: v7x
topology: tpu7x:2x2x1
jax: 0.10.0
libtpu: 0.0.40
codegen_flags: <defaults>
</compile_context>

<pallas_src>
import functools

import jax
import jax.numpy as jnp
from jax.experimental import pallas as pl
from jax.experimental.pallas import tpu as pltpu


def _round_up(x, m):
    return (x + m - 1) // m * m


def _vmem_input_budget_bytes():
    """Byte budget for the double-buffered input blocks (2 inputs x 2 buffers)."""
    default = 24 * 1024 * 1024  # conservative: fits v7x's 64 MiB physical VMEM
    try:
        cap = getattr(pltpu.get_tpu_info(), "vmem_capacity_bytes", None)
        if cap:
            # ~1/3 of capacity for the input blocks, capped; larger on 128 MiB parts.
            return int(min(cap // 3, 48 * 1024 * 1024))
    except Exception:
        pass
    return default


def _pick_tile_rows(n_rows, n_cols, itemsize, budget_bytes):
    """Largest row tile whose (2 inputs x 2 pipeline buffers) blocks fit budget."""
    bytes_per_row = 4 * n_cols * itemsize
    tn = budget_bytes // max(bytes_per_row, 1)
    tn = max(8, min(int(tn), 1024))
    if itemsize < 4:
        tn = max(16, (tn // 16) * 16)   # bf16 sublane packing
    else:
        tn = (tn // 8) * 8              # f32 sublane alignment
    tn = min(tn, _round_up(n_rows, 8))  # never exceed (padded) N
    return max(tn, 8)


def _ce_rows(pred_ref, tgt_ref):
    """Per-row soft-target cross entropy for one (tn, C) tile -> (tn, 1) f32."""
    x = pred_ref[...].astype(jnp.float32)
    t = tgt_ref[...].astype(jnp.float32)
    m = jnp.max(x, axis=1, keepdims=True)
    lse = jnp.log(jnp.sum(jnp.exp(x - m), axis=1, keepdims=True)) + m
    # ce = -sum_c t * (x - lse) = lse * sum_c t - sum_c t * x
    return (lse * jnp.sum(t, axis=1, keepdims=True)
            - jnp.sum(t * x, axis=1, keepdims=True))


def _ce_partial_kernel(pred_ref, tgt_ref, out_ref, *, n_rows, tile_n, ragged):
    """Per-tile partial sum of CE, broadcast into a lane-dense (1,1,128) block."""
    ce = _ce_rows(pred_ref, tgt_ref)                       # (tn, 1)
    if ragged:  # mask rows past true N (statically emitted only when needed)
        i = pl.program_id(0)
        row_ids = i * tile_n + jax.lax.broadcasted_iota(jnp.int32, (tile_n, 1), 0)
        ce = jnp.where(row_ids < n_rows, ce, 0.0)
    out_ref[...] = jnp.full(out_ref.shape, jnp.sum(ce), dtype=out_ref.dtype)


def _ce_none_kernel(pred_ref, tgt_ref, out_ref):
    """Per-row cross entropy, stored as a (tn, 1) column block."""
    out_ref[...] = _ce_rows(pred_ref, tgt_ref)


def cross_entropy_loss(prediction, target, custom_loss_reduction="mean",
                       max_rows_per_tile=None):
    """Pallas TPU implementation of the CrossEntropyLoss module forward."""
    assert prediction.shape == target.shape and prediction.ndim == 2
    N, C = prediction.shape
    itemsize = max(jnp.dtype(prediction.dtype).itemsize,
                   jnp.dtype(target.dtype).itemsize)
    budget = _vmem_input_budget_bytes()
    tn = _pick_tile_rows(N, C, itemsize, budget)
    if max_rows_per_tile is not None:
        tn = min(tn, max(8, (int(max_rows_per_tile) // 8) * 8))
    num_tiles = pl.cdiv(N, tn)

    in_specs = [pl.BlockSpec((tn, C), lambda i: (i, 0)),
                pl.BlockSpec((tn, C), lambda i: (i, 0))]
    compiler_params = pltpu.CompilerParams(
        dimension_semantics=("parallel",),          # independent tiles -> megacore
        vmem_limit_bytes=int(budget + 8 * 1024 * 1024),
    )

    if custom_loss_reduction in ("mean", "sum"):
        kernel = functools.partial(_ce_partial_kernel, n_rows=N, tile_n=tn,
                                   ragged=(N % tn != 0))
        partials = pl.pallas_call(
            kernel,
            out_shape=jax.ShapeDtypeStruct((num_tiles, 1, 128), jnp.float32),
            grid=(num_tiles,),
            in_specs=in_specs,
            out_specs=pl.BlockSpec((1, 1, 128), lambda i: (i, 0, 0)),
            compiler_params=compiler_params,
        )(prediction, target)
        total = jnp.sum(partials[:, 0, 0])          # tiny reduce over num_tiles
        if custom_loss_reduction == "mean":
            total = total / jnp.float32(N)
        return total

    # No reduction: per-sample cross entropy of shape (N,)
    out = pl.pallas_call(
        _ce_none_kernel,
        out_shape=jax.ShapeDtypeStruct((N, 1), jnp.float32),
        grid=(num_tiles,),
        in_specs=in_specs,
        out_specs=pl.BlockSpec((tn, 1), lambda i: (i, 0)),
        compiler_params=compiler_params,
    )(prediction, target)
    return out[:, 0]


def _reference(prediction, target, custom_loss_reduction):
    log_sm = jax.nn.log_softmax(prediction.astype(jnp.float32), axis=1)
    ce = -jnp.sum(target.astype(jnp.float32) * log_sm, axis=1)
    if custom_loss_reduction == "mean":
        return ce.mean()
    if custom_loss_reduction == "sum":
        return ce.sum()
    return ce


if __name__ == "__main__":
    key = jax.random.PRNGKey(0)
    ok = True
    # Second case forces multiple tiles + a ragged tail (80 rows, 32-row cap).
    for case_i, (N, C, cap) in enumerate([(8, 32, None), (80, 33, 32)]):
        k1, k2 = jax.random.split(jax.random.fold_in(key, case_i))
        prediction = jax.random.normal(k1, (N, C), dtype=jnp.float32)
        # soft targets: probability distribution per row
        target = jax.nn.softmax(
            jax.random.normal(k2, (N, C), dtype=jnp.float32), axis=1)
        for red in ("mean", "sum", "none"):
            out = cross_entropy_loss(prediction, target,
                                     custom_loss_reduction=red,
                                     max_rows_per_tile=cap)
            out = jax.block_until_ready(out)
            ref = _reference(prediction, target, red)
            if not jnp.allclose(out, ref, rtol=1e-5, atol=1e-5):
                ok = False
                print(f"MISMATCH N={N} C={C} red={red}: kernel={out} ref={ref}")

    if ok:
        print("KERNEL_OK")
</pallas_src>

<mosaic_0001>
module attributes {stable_mosaic.version = 11 : i64} {
  func.func @_ce_partial_kernel(%arg0: i32, %arg1: memref<8x32xf32, #tpu.memory_space<vmem>>, %arg2: memref<8x32xf32, #tpu.memory_space<vmem>>, %arg3: memref<1x1x128xf32, #tpu.memory_space<vmem>>) attributes {dimension_semantics = [#tpu.dimension_semantics<parallel>], iteration_bounds = array<i64: 1>, scalar_prefetch = 0 : i64, scratch_operands = 0 : i64, tpu.core_type = #tpu.core_type<tc>, window_params = [{transform_indices = @transform_0, window_bounds = array<i64: 8, 32>}, {transform_indices = @transform_1, window_bounds = array<i64: 8, 32>}, {transform_indices = @transform_2, window_bounds = array<i64: 1, 1, 128>}]} {
    %c0 = arith.constant 0 : index
    %c0_0 = arith.constant 0 : index
    %0 = vector.load %arg1[%c0, %c0_0] : memref<8x32xf32, #tpu.memory_space<vmem>>, vector<8x32xf32>
    %c0_1 = arith.constant 0 : index
    %c0_2 = arith.constant 0 : index
    %1 = vector.load %arg2[%c0_1, %c0_2] : memref<8x32xf32, #tpu.memory_space<vmem>>, vector<8x32xf32>
    %cst = arith.constant dense<0xFF800000> : vector<8xf32>
    %2 = vector.multi_reduction <maximumf>, %0, %cst [1] : vector<8x32xf32> to vector<8xf32>
    %3 = vector.shape_cast %2 : vector<8xf32> to vector<8x1xf32>
    %4 = vector.broadcast %3 : vector<8x1xf32> to vector<8x32xf32>
    %5 = arith.subf %0, %4 : vector<8x32xf32>
    %6 = math.exp %5 : vector<8x32xf32>
    %cst_3 = arith.constant dense<0.000000e+00> : vector<8xf32>
    %7 = vector.multi_reduction <add>, %6, %cst_3 [1] : vector<8x32xf32> to vector<8xf32>
    %8 = vector.shape_cast %7 : vector<8xf32> to vector<8x1xf32>
    %9 = math.log %8 : vector<8x1xf32>
    %10 = arith.addf %9, %3 : vector<8x1xf32>
    %cst_4 = arith.constant dense<0.000000e+00> : vector<8xf32>
    %11 = vector.multi_reduction <add>, %1, %cst_4 [1] : vector<8x32xf32> to vector<8xf32>
    %12 = vector.shape_cast %11 : vector<8xf32> to vector<8x1xf32>
    %13 = arith.mulf %10, %12 : vector<8x1xf32>
    %14 = arith.mulf %1, %0 : vector<8x32xf32>
    %cst_5 = arith.constant dense<0.000000e+00> : vector<8xf32>
    %15 = vector.multi_reduction <add>, %14, %cst_5 [1] : vector<8x32xf32> to vector<8xf32>
    %16 = vector.shape_cast %15 : vector<8xf32> to vector<8x1xf32>
    %17 = arith.subf %13, %16 : vector<8x1xf32>
    %18 = vector.shape_cast %17 : vector<8x1xf32> to vector<1x8x1xf32>
    %cst_6 = arith.constant dense<0.000000e+00> : vector<1xf32>
    %19 = vector.multi_reduction <add>, %18, %cst_6 [1, 2] : vector<1x8x1xf32> to vector<1xf32>
    %20 = vector.shape_cast %19 : vector<1xf32> to vector<1x1x1xf32>
    %21 = vector.extract %20[0, 0, 0] : f32 from vector<1x1x1xf32>
    %22 = vector.broadcast %21 : f32 to vector<1x1x128xf32>
    %c0_7 = arith.constant 0 : index
    %c0_8 = arith.constant 0 : index
    %c0_9 = arith.constant 0 : index
    %23 = vector.load %arg3[%c0_7, %c0_8, %c0_9] : memref<1x1x128xf32, #tpu.memory_space<vmem>>, vector<1x1x128xf32>
    tpu.vector_store %arg3[%c0_7, %c0_8, %c0_9], %22 {strides = array<i32>} : memref<1x1x128xf32, #tpu.memory_space<vmem>>, vector<1x1x128xf32>,
    return
  }
  func.func @transform_0(%arg0: i32) -> (i32, i32) {
    %c0_i32 = arith.constant 0 : i32
    %c0_i32_0 = arith.constant 0 : i32
    return %arg0, %c0_i32 : i32, i32
  }
  func.func @transform_1(%arg0: i32) -> (i32, i32) {
    %c0_i32 = arith.constant 0 : i32
    %c0_i32_0 = arith.constant 0 : i32
    return %arg0, %c0_i32 : i32, i32
  }
  func.func @transform_2(%arg0: i32) -> (i32, i32, i32) {
    %c0_i32 = arith.constant 0 : i32
    %c0_i32_0 = arith.constant 0 : i32
    %c0_i32_1 = arith.constant 0 : i32
    return %arg0, %c0_i32, %c0_i32_0 : i32, i32, i32
  }
}

</mosaic_0001>

<llo_original>
// kernel: tpu_custom_call.1
$region0: #{tpu_custom_call.1}
  #allocation0 [shape = 'u32[]', space=smem, size = 0x4, offset = 0x4, fixed_abs, tag = 'smem constant byte address 0x4 - core index']
  #allocation1 [shape = 'u32[144,128]{1,0:T(1,128)}', space=vmem, size = 0x12000, scoped, tag = 'internal scratch']
  %s0 = inlined_call_operand.hbm [shape: f32[8,32], index: 0, kind: input, shape index: {}]
  %s1 = inlined_call_operand.hbm [shape: f32[8,32], index: 1, kind: input, shape index: {}]
  %s2 = inlined_call_operand.hbm [shape: f32[1,1,128], index: 2, kind: output, shape index: {}]
  %s3 = sld [smem:[#allocation0]]
  $region26: #{tpu_custom_call.1} parent=0
    _
  %s5 = ssub.s32 1, %s3
  %s6 = scalar_select 0, %s5, %s3
  $region1: #{tpu_custom_call.1} parent=0
    #allocation2 [shape = 'u8[4096]{0}', space=vmem, size = 0x1000, scoped, tag = 'input window, operand 0, single buffered']
    #allocation3 [shape = 's32[1]{0}', space=sflag, size = 0x4, scoped, tag = 'scoped memory for tpu_custom_call.1']
    #allocation4 [shape = 's32[1]{0}', space=sflag, size = 0x4, scoped, tag = 'scoped memory for tpu_custom_call.1']
    #allocation5 [shape = 'u8[4096]{0}', space=vmem, size = 0x1000, scoped, tag = 'input window, operand 1, single buffered']
    #allocation6 [shape = 's32[1]{0}', space=sflag, size = 0x4, scoped, tag = 'scoped memory for tpu_custom_call.1']
    #allocation7 [shape = 'u8[512]{0}', space=vmem, size = 0x400, scoped, tag = 'output window, operand 0, single buffered']
    %7 = vsyncpa [#allocation3], 0
    %8 = vsyncpa [#allocation6], 0
    %9 = vsyncpa [#allocation4], 0
    // Predicated region
    $region2: #{tpu_custom_call.1} parent=1 // pred_check
      _
    $region3: #{tpu_custom_call.1} parent=1 // pred_check_branch
      %11 = sbr.rel (0) target = $region5
    $region4: #{tpu_custom_call.1} parent=1 // pred_region
      %s13 = ssub.s32 128, 128
      %14 = vsyncadd [#allocation3], %s13
      %s16 = sshll.u32 [#allocation2], 4
      %s17 = int_to_ptr.vmem [resolvable:$true] %s16
      %19 = dma.hbm_to_vmem [thread:$0]  %s0, 128, %s17, [#allocation3]
    $region5: #{tpu_custom_call.1} parent=1 // pred_fallthru
      _
    // Predicated region
    $region6: #{tpu_custom_call.1} parent=1 // pred_check
      _
    $region7: #{tpu_custom_call.1} parent=1 // pred_check_branch
      %21 = sbr.rel (0) target = $region9
    $region8: #{tpu_custom_call.1} parent=1 // pred_region
      %s23 = ssub.s32 128, 128
      %24 = vsyncadd [#allocation6], %s23
      %s26 = sshll.u32 [#allocation5], 4
      %s27 = int_to_ptr.vmem [resolvable:$true] %s26
      %29 = dma.hbm_to_vmem [thread:$0]  %s1, 128, %s27, [#allocation6]
    $region9: #{tpu_custom_call.1} parent=1 // pred_fallthru
      _
    // Predicated region
    $region10: #{tpu_custom_call.1} parent=1 // pred_check
      _
    $region11: #{tpu_custom_call.1} parent=1 // pred_check_branch
      %31 = sbr.rel (0) target = $region13
    $region12: #{tpu_custom_call.1} parent=1 // pred_region
      %32 = dma.done [#allocation3], 128
    $region13: #{tpu_custom_call.1} parent=1 // pred_fallthru
      _
    // Predicated region
    $region14: #{tpu_custom_call.1} parent=1 // pred_check
      _
    $region15: #{tpu_custom_call.1} parent=1 // pred_check_branch
      %34 = sbr.rel (0) target = $region17
    $region16: #{tpu_custom_call.1} parent=1 // pred_region
      %35 = dma.done [#allocation6], 128
    $region17: #{tpu_custom_call.1} parent=1 // pred_fallthru
      _
    %v36 = vld [vmem:[#allocation2] sm:$0xff]
    %v37 = vld [vmem:[#allocation5] sm:$0xff]
    %vm38 = vcmask 261120
    %v39 = vsel %vm38, %v36, -inf
    %40 = vmax.xlane.f32.xlu0 %v39
    %v41 = vpop.xlane.xlu0 %40
    %v42 = vsub.f32 %v36, %v41
    %v43 = vmul.f32 %v42, 1.442695
    %v44 = vpow.pop %v43
    %v45 = vsel %vm38, %v44, 0.0
    %46 = vadd.xlane.f32.xlu0 %v45
    %v47 = vpop.xlane.xlu0 %46
    %v48 = vlog2.pop %v47
    %v49 = vmul.f32 %v48, 0.6931472
    %v50 = vadd.f32 %v49, %v41
    %v51 = vsel %vm38, %v37, 0.0
    %52 = vadd.xlane.f32.xlu0 %v51
    %v53 = vpop.xlane.xlu0 %52
    %v54 = vmul.f32 %v50, %v53
    %v55 = vmul.f32 %v37, %v36
    %v56 = vsel %vm38, %v55, 0.0
    %57 = vadd.xlane.f32.xlu0 %v56
    %v58 = vpop.xlane.xlu0 %57
    %v59 = vsub.f32 %v54, %v58
    %vm60 = vcmask 7168
    %v61 = vsel %vm60, %v59, 0.0
    %62 = vadd.xlane.f32.xlu0 %v61
    %v63 = vpop.xlane.xlu0 %62
    %v64 = vrot.slane %v63, 4
    %v65 = vadd.f32 %v63, %v64
    %v66 = vrot.slane %v65, 2
    %v67 = vadd.f32 %v65, %v66
    %v68 = vrot.slane %v67, 1
    %v69 = vadd.f32 %v67, %v68
    %s70 = vtos %v69
    %v71 = vstv %s70
    %72 = vst [vmem:[#allocation7] sm:$0x1] %v71
    // Predicated region
    $region18: #{tpu_custom_call.1} parent=1 // pred_check
      _
    $region19: #{tpu_custom_call.1} parent=1 // pred_check_branch
      %74 = sbr.rel (0) target = $region21
    $region20: #{tpu_custom_call.1} parent=1 // pred_region
      %s76 = ssub.s32 16, 16
      %77 = vsyncadd [#allocation4], %s76
      %s79 = sshll.u32 [#allocation7], 4
      %s80 = int_to_ptr.vmem [resolvable:$true] %s79
      %82 = dma.vmem_to_hbm [thread:$0]  %s80, 16, %s2, [#allocation4]
    $region21: #{tpu_custom_call.1} parent=1 // pred_fallthru
      _
    // Predicated region
    $region22: #{tpu_custom_call.1} parent=1 // pred_check
      _
    $region23: #{tpu_custom_call.1} parent=1 // pred_check_branch
      %84 = sbr.rel (0) target = $region25
    $region24: #{tpu_custom_call.1} parent=1 // pred_region
      %85 = dma.done [#allocation4], 16
    $region25: #{tpu_custom_call.1} parent=1 // pred_fallthru
      _
    %86 = vsyncpa [#allocation3], 1
    %87 = vsyncpa [#allocation6], 1
    %88 = vsyncpa [#allocation4], 1

</llo_original>
